<compile_context>
chip_gen: v6e
topology: v6e:2x2x1
jax: 0.10.0
libtpu: 0.0.40
codegen_flags: <defaults>
</compile_context>

<pallas_src>
import math

import jax
import jax.numpy as jnp
from jax import lax
from jax.experimental import pallas as pl
from jax.experimental.pallas import tpu as pltpu


def _round_up(x, m):
    return ((x + m - 1) // m) * m


def _signed_asinh(z):
    # sign-symmetric arcsinh: avoids catastrophic cancellation for z << 0.
    az = jnp.abs(z)
    return jnp.sign(z) * jnp.log(az + jnp.sqrt(az * az + 1.0))


# --------------------------------------------------------------------------
# Prologue kernel: per-class prep (O(C*D)), tiled on the class dimension.
# stats rows: 0=||p_poinc||^2, 1=<p_poinc,a_poinc>, 2=||a_poinc||, 3=scale,
#             4..7 = zero padding (to make an (8, tC) lane-dense slab).
# --------------------------------------------------------------------------
def _class_prep_kernel(a_ref, p_ref, k_ref, p_poinc_ref, a_poinc_ref, stats_ref):
    k = k_ref[0]
    sqrt_k = jnp.sqrt(k)
    a = a_ref[...].astype(jnp.float32)                              # (tC, D)
    p = p_ref[...].astype(jnp.float32)                              # (tC, D)

    # poincare_exp0(p, k): tanh(sqrt(k)*||p||) * p / (sqrt(k)*||p||)
    p_norm = jnp.maximum(jnp.sqrt(jnp.sum(p * p, axis=-1, keepdims=True)), 1e-5)
    p_poinc = jnp.tanh(sqrt_k * p_norm) * p / (sqrt_k * p_norm)     # (tC, D)

    # conformal factor exactly as in forward(): 1 + k * ||p_poincare||^2
    p2 = jnp.sum(p_poinc * p_poinc, axis=-1, keepdims=True)         # (tC, 1)
    conf = 1.0 + k * p2
    a_poinc = a * conf                                              # (tC, D)

    a_norm = jnp.sqrt(jnp.sum(a_poinc * a_poinc, axis=-1, keepdims=True))
    pa = jnp.sum(p_poinc * a_poinc, axis=-1, keepdims=True)
    lambda_pk = 2.0 / (1.0 - k * p2)
    scale = lambda_pk * a_norm / sqrt_k                             # (tC, 1)

    p_poinc_ref[...] = p_poinc.astype(p_poinc_ref.dtype)
    a_poinc_ref[...] = a_poinc.astype(a_poinc_ref.dtype)

    tc = stats_ref.shape[-1]
    pad = jnp.zeros((4, tc), jnp.float32)
    stats_ref[...] = jnp.concatenate(
        [p2.T, pa.T, a_norm.T, scale.T, pad], axis=0).astype(stats_ref.dtype)


# --------------------------------------------------------------------------
# Main kernel: one (tN, tC) logits tile per grid step.
# --------------------------------------------------------------------------
def _mlr_kernel(x_ref, p_ref, a_ref, stats_ref, k_ref, out_ref):
    k = k_ref[0]
    sqrt_k = jnp.sqrt(k)

    x = x_ref[...].astype(jnp.float32)                              # (tN, D)
    x2 = jnp.sum(x * x, axis=-1, keepdims=True)                     # (tN, 1)

    # per-class rows, already laid out lane-dense as (1, tC)
    p2_t = stats_ref[0:1, :]
    pa_t = stats_ref[1:2, :]
    a_norm_t = stats_ref[2:3, :]
    scale_t = stats_ref[3:4, :]

    # MXU matmuls: contract last dims of both operands (no .T / XLU transpose)
    dn = (((1,), (1,)), ((), ()))
    px = lax.dot_general(x, p_ref[...].astype(jnp.float32), dn,
                         preferred_element_type=jnp.float32)        # (tN, tC) = X.P
    xa = lax.dot_general(x, a_ref[...].astype(jnp.float32), dn,
                         preferred_element_type=jnp.float32)        # (tN, tC) = X.A

    # mobius_addition_batch(-P, X, k), expanded analytically.
    two_k_xy = (-2.0 * k) * px                                      # 2k<xp, x>
    num_coef = 1.0 + two_k_xy + k * x2                              # (tN, tC)
    den = 1.0 + two_k_xy + (k * k) * p2_t * x2 + 1e-5               # (tN, tC)
    inv_den = pl.reciprocal(den)
    one_m_kp2 = 1.0 - k * p2_t                                      # (1, tC)

    # <mob_add, A>  and  ||mob_add||^2
    ma_dot_a = (one_m_kp2 * xa - num_coef * pa_t) * inv_den
    ma_sq = (num_coef * num_coef * p2_t
             - 2.0 * num_coef * one_m_kp2 * px
             + one_m_kp2 * one_m_kp2 * x2) * (inv_den * inv_den)

    # hyperbolic softmax logits
    z = (2.0 * sqrt_k) * ma_dot_a * pl.reciprocal(a_norm_t * (1.0 - k * ma_sq))
    out_ref[...] = (scale_t * _signed_asinh(z)).astype(out_ref.dtype)


# --------------------------------------------------------------------------
# Wrapper: padding, tiling, and the two pallas_calls.
# --------------------------------------------------------------------------
def hyperbolic_mlr(x, a_vals, p_vals, k, *, tile_n=256, tile_c=512):
    """x: (N, D); a_vals, p_vals: (C, D); returns logits (N, C)."""
    N, D = x.shape
    C, _ = a_vals.shape

    # Batch tile: multiple of 8 (sublane); class tile: multiple of 128 (lane-dense
    # output stores). Tiles fit comfortably under the default scoped VMEM on all
    # of v5e / v6e / v7x for D up to ~1k; bump tile_n / tile_c for big v6e runs.
    n8 = _round_up(N, 8)
    tN = min(tile_n, n8)
    N_pad = _round_up(N, tN)

    c128 = _round_up(C, 128)
    tC = min(tile_c, c128)
    C_pad = _round_up(C, tC)

    if N_pad != N:
        x = jnp.pad(x, ((0, N_pad - N), (0, 0)))
    if C_pad != C:
        a_vals = jnp.pad(a_vals, ((0, C_pad - C), (0, 0)))
        p_vals = jnp.pad(p_vals, ((0, C_pad - C), (0, 0)))

    k_arr = jnp.asarray([k], dtype=jnp.float32)

    # ---- per-class prologue (runs once, not per batch tile) ----
    p_poinc, a_poinc, stats = pl.pallas_call(
        _class_prep_kernel,
        out_shape=(jax.ShapeDtypeStruct((C_pad, D), jnp.float32),
                   jax.ShapeDtypeStruct((C_pad, D), jnp.float32),
                   jax.ShapeDtypeStruct((8, C_pad), jnp.float32)),
        grid=(C_pad // tC,),
        in_specs=[pl.BlockSpec((tC, D), lambda j: (j, 0)),
                  pl.BlockSpec((tC, D), lambda j: (j, 0)),
                  pl.BlockSpec(memory_space=pltpu.SMEM)],        # scalar k
        out_specs=(pl.BlockSpec((tC, D), lambda j: (j, 0)),
                   pl.BlockSpec((tC, D), lambda j: (j, 0)),
                   pl.BlockSpec((8, tC), lambda j: (0, j))),
        compiler_params=pltpu.CompilerParams(
            dimension_semantics=("parallel",)),
    )(a_vals, p_vals, k_arr)

    # ---- main (tN, tC)-tiled kernel ----
    cost = pl.CostEstimate(
        flops=int(4 * N_pad * C_pad * D + 30 * N_pad * C_pad),
        transcendentals=int(3 * N_pad * C_pad),
        bytes_accessed=int(4 * (N_pad * D + 2 * C_pad * D
                                + N_pad * C_pad + 8 * C_pad)),
    )
    out = pl.pallas_call(
        _mlr_kernel,
        out_shape=jax.ShapeDtypeStruct((N_pad, C_pad), x.dtype),
        grid=(N_pad // tN, C_pad // tC),
        in_specs=[pl.BlockSpec((tN, D), lambda i, j: (i, 0)),     # x
                  pl.BlockSpec((tC, D), lambda i, j: (j, 0)),     # p_poincare
                  pl.BlockSpec((tC, D), lambda i, j: (j, 0)),     # a_poincare
                  pl.BlockSpec((8, tC), lambda i, j: (0, j)),     # class stats
                  pl.BlockSpec(memory_space=pltpu.SMEM)],         # scalar k
        out_specs=pl.BlockSpec((tN, tC), lambda i, j: (i, j)),
        compiler_params=pltpu.CompilerParams(
            dimension_semantics=("parallel", "parallel"),
            vmem_limit_bytes=48 * 1024 * 1024),
        cost_estimate=cost,
    )(x, p_poinc, a_poinc, stats, k_arr)

    return out[:N, :C]


# --------------------------------------------------------------------------
# Pure-JAX reference (same math as the PyTorch module).
# --------------------------------------------------------------------------
def hyperbolic_mlr_ref(x, a_vals, p_vals, k):
    sqrt_k = jnp.sqrt(k)
    p_norm = jnp.maximum(jnp.linalg.norm(p_vals, axis=-1, keepdims=True), 1e-5)
    p_poinc = jnp.tanh(sqrt_k * p_norm) * p_vals / (sqrt_k * p_norm)
    conf = 1.0 + k * jnp.sum(p_poinc ** 2, axis=1, keepdims=True)
    a_poinc = a_vals * conf

    # mobius_addition_batch(-P, X, k) -> (C, N, D)
    xp = -p_poinc                                    # (C, D)
    xy = jnp.einsum("ij,kj->ik", xp, x)              # (C, N)
    x2 = jnp.sum(xp ** 2, axis=-1, keepdims=True)    # (C, 1)
    y2 = jnp.sum(x ** 2, axis=-1, keepdims=True)     # (N, 1)
    num = (1.0 + 2.0 * k * xy + k * y2.T)[:, :, None] * xp[:, None, :]
    num = num + (1.0 - k * x2)[:, :, None] * x[None, :, :]
    den = 1.0 + 2.0 * k * xy + (k ** 2) * x2 * y2.T
    mob = num / (den[:, :, None] + 1e-5)             # (C, N, D)

    lambda_pk = 2.0 / (1.0 - k * jnp.sum(p_poinc ** 2, axis=1))
    kk = lambda_pk * jnp.linalg.norm(a_poinc, axis=1) / sqrt_k
    numer = 2.0 * sqrt_k * jnp.sum(mob * a_poinc[:, None, :], axis=-1)
    denom = jnp.linalg.norm(a_poinc, axis=1, keepdims=True) * (
        1.0 - k * jnp.sum(mob ** 2, axis=2))
    logit = kk[:, None] * jnp.arcsinh(numer / denom)
    return logit.T                                   # (N, C)


if __name__ == "__main__":
    # Module hyper-params (small, consistent with HyperbolicMLR(dim, n_classes, k))
    dim, n_classes, k = 32, 16, 0.1
    batch = 8

    key = jax.random.PRNGKey(0)
    kx, ka, kp = jax.random.split(key, 3)

    # kaiming_uniform_(a=sqrt(5)) on a (n_classes, dim) tensor -> U(-b, b),
    # b = sqrt(6 / ((1 + 5) * fan_in)) = 1 / sqrt(dim)
    bound = 1.0 / math.sqrt(dim)
    a_vals = jax.random.uniform(ka, (n_classes, dim), jnp.float32, -bound, bound)
    p_vals = jax.random.uniform(kp, (n_classes, dim), jnp.float32, -bound, bound)

    # Keep x inside the Poincare ball of curvature k (||x|| < 1/sqrt(k))
    x = 0.3 * jax.random.normal(kx, (batch, dim), jnp.float32)

    out = hyperbolic_mlr(x, a_vals, p_vals, k)
    out = jax.block_until_ready(out)

    ref = hyperbolic_mlr_ref(x, a_vals, p_vals, jnp.float32(k))
    assert out.shape == (batch, n_classes)
    assert jnp.allclose(out, ref, atol=1e-4, rtol=1e-4), (
        f"max abs err {jnp.max(jnp.abs(out - ref))}")

    print("KERNEL_OK")
</pallas_src>

<mosaic_0001>
module attributes {stable_mosaic.version = 11 : i64} {
  func.func @_class_prep_kernel(%arg0: i32, %arg1: memref<128x32xf32, #tpu.memory_space<vmem>>, %arg2: memref<128x32xf32, #tpu.memory_space<vmem>>, %arg3: memref<1xf32, #tpu.memory_space<smem>>, %arg4: memref<128x32xf32, #tpu.memory_space<vmem>>, %arg5: memref<128x32xf32, #tpu.memory_space<vmem>>, %arg6: memref<8x128xf32, #tpu.memory_space<vmem>>) attributes {dimension_semantics = [#tpu.dimension_semantics<parallel>], iteration_bounds = array<i64: 1>, scalar_prefetch = 0 : i64, scratch_operands = 0 : i64, tpu.core_type = #tpu.core_type<tc>, window_params = [{transform_indices = @transform_0, window_bounds = array<i64: 128, 32>}, {transform_indices = @transform_1, window_bounds = array<i64: 128, 32>}, {transform_indices = @transform_2, window_bounds = array<i64: 1>}, {transform_indices = @transform_3, window_bounds = array<i64: 128, 32>}, {transform_indices = @transform_4, window_bounds = array<i64: 128, 32>}, {transform_indices = @transform_5, window_bounds = array<i64: 8, 128>}]} {
    %c0 = arith.constant 0 : index
    %0 = memref.load %arg3[%c0] : memref<1xf32, #tpu.memory_space<smem>>
    %1 = math.sqrt %0 : f32
    %c0_0 = arith.constant 0 : index
    %c0_1 = arith.constant 0 : index
    %2 = vector.load %arg1[%c0_0, %c0_1] : memref<128x32xf32, #tpu.memory_space<vmem>>, vector<128x32xf32>
    %c0_2 = arith.constant 0 : index
    %c0_3 = arith.constant 0 : index
    %3 = vector.load %arg2[%c0_2, %c0_3] : memref<128x32xf32, #tpu.memory_space<vmem>>, vector<128x32xf32>
    %4 = arith.mulf %3, %3 : vector<128x32xf32>
    %cst = arith.constant dense<0.000000e+00> : vector<128xf32>
    %5 = vector.multi_reduction <add>, %4, %cst [1] : vector<128x32xf32> to vector<128xf32>
    %6 = vector.shape_cast %5 : vector<128xf32> to vector<128x1xf32>
    %7 = math.sqrt %6 : vector<128x1xf32>
    %cst_4 = arith.constant 9.99999974E-6 : f32
    %8 = vector.broadcast %cst_4 : f32 to vector<128x1xf32>
    %9 = arith.maximumf %7, %8 : vector<128x1xf32>
    %10 = vector.broadcast %1 : f32 to vector<128x1xf32>
    %11 = arith.mulf %10, %9 : vector<128x1xf32>
    %12 = math.tanh %11 : vector<128x1xf32>
    %13 = vector.broadcast %12 : vector<128x1xf32> to vector<128x32xf32>
    %14 = arith.mulf %13, %3 : vector<128x32xf32>
    %15 = vector.broadcast %1 : f32 to vector<128x1xf32>
    %16 = arith.mulf %15, %9 : vector<128x1xf32>
    %17 = vector.broadcast %16 : vector<128x1xf32> to vector<128x32xf32>
    %18 = arith.divf %14, %17 : vector<128x32xf32>
    %19 = arith.mulf %18, %18 : vector<128x32xf32>
    %cst_5 = arith.constant dense<0.000000e+00> : vector<128xf32>
    %20 = vector.multi_reduction <add>, %19, %cst_5 [1] : vector<128x32xf32> to vector<128xf32>
    %21 = vector.shape_cast %20 : vector<128xf32> to vector<128x1xf32>
    %22 = vector.broadcast %0 : f32 to vector<128x1xf32>
    %23 = arith.mulf %22, %21 : vector<128x1xf32>
    %cst_6 = arith.constant 1.000000e+00 : f32
    %24 = vector.broadcast %cst_6 : f32 to vector<128x1xf32>
    %25 = arith.addf %24, %23 : vector<128x1xf32>
    %26 = vector.broadcast %25 : vector<128x1xf32> to vector<128x32xf32>
    %27 = arith.mulf %2, %26 : vector<128x32xf32>
    %28 = arith.mulf %27, %27 : vector<128x32xf32>
    %cst_7 = arith.constant dense<0.000000e+00> : vector<128xf32>
    %29 = vector.multi_reduction <add>, %28, %cst_7 [1] : vector<128x32xf32> to vector<128xf32>
    %30 = vector.shape_cast %29 : vector<128xf32> to vector<128x1xf32>
    %31 = math.sqrt %30 : vector<128x1xf32>
    %32 = arith.mulf %18, %27 : vector<128x32xf32>
    %cst_8 = arith.constant dense<0.000000e+00> : vector<128xf32>
    %33 = vector.multi_reduction <add>, %32, %cst_8 [1] : vector<128x32xf32> to vector<128xf32>
    %34 = vector.shape_cast %33 : vector<128xf32> to vector<128x1xf32>
    %35 = vector.broadcast %0 : f32 to vector<128x1xf32>
    %36 = arith.mulf %35, %21 : vector<128x1xf32>
    %cst_9 = arith.constant 1.000000e+00 : f32
    %37 = vector.broadcast %cst_9 : f32 to vector<128x1xf32>
    %38 = arith.subf %37, %36 : vector<128x1xf32>
    %cst_10 = arith.constant 2.000000e+00 : f32
    %39 = vector.broadcast %cst_10 : f32 to vector<128x1xf32>
    %40 = arith.divf %39, %38 : vector<128x1xf32>
    %41 = arith.mulf %40, %31 : vector<128x1xf32>
    %42 = vector.broadcast %1 : f32 to vector<128x1xf32>
    %43 = arith.divf %41, %42 : vector<128x1xf32>
    %c0_11 = arith.constant 0 : index
    %c0_12 = arith.constant 0 : index
    %44 = vector.load %arg4[%c0_11, %c0_12] : memref<128x32xf32, #tpu.memory_space<vmem>>, vector<128x32xf32>
    tpu.vector_store %arg4[%c0_11, %c0_12], %18 {strides = array<i32>} : memref<128x32xf32, #tpu.memory_space<vmem>>, vector<128x32xf32>,
    %c0_13 = arith.constant 0 : index
    %c0_14 = arith.constant 0 : index
    %45 = vector.load %arg5[%c0_13, %c0_14] : memref<128x32xf32, #tpu.memory_space<vmem>>, vector<128x32xf32>
    tpu.vector_store %arg5[%c0_13, %c0_14], %27 {strides = array<i32>} : memref<128x32xf32, #tpu.memory_space<vmem>>, vector<128x32xf32>,
    %cst_15 = arith.constant 0.000000e+00 : f32
    %46 = vector.broadcast %cst_15 : f32 to vector<4x128xf32>
    %47 = tpu.transpose %21, [1, 0] : vector<128x1xf32> -> vector<1x128xf32>
    %48 = tpu.transpose %34, [1, 0] : vector<128x1xf32> -> vector<1x128xf32>
    %49 = tpu.transpose %31, [1, 0] : vector<128x1xf32> -> vector<1x128xf32>
    %50 = tpu.transpose %43, [1, 0] : vector<128x1xf32> -> vector<1x128xf32>
    %51 = tpu.concatenate %47, %48, %49, %50, %46 in 0 : vector<1x128xf32>, vector<1x128xf32>, vector<1x128xf32>, vector<1x128xf32>, vector<4x128xf32> -> vector<8x128xf32>
    %c0_16 = arith.constant 0 : index
    %c0_17 = arith.constant 0 : index
    %52 = vector.load %arg6[%c0_16, %c0_17] : memref<8x128xf32, #tpu.memory_space<vmem>>, vector<8x128xf32>
    tpu.vector_store %arg6[%c0_16, %c0_17], %51 {strides = array<i32>} : memref<8x128xf32, #tpu.memory_space<vmem>>, vector<8x128xf32>,
    return
  }
  func.func @transform_0(%arg0: i32) -> (i32, i32) {
    %c0_i32 = arith.constant 0 : i32
    %c0_i32_0 = arith.constant 0 : i32
    return %arg0, %c0_i32 : i32, i32
  }
  func.func @transform_1(%arg0: i32) -> (i32, i32) {
    %c0_i32 = arith.constant 0 : i32
    %c0_i32_0 = arith.constant 0 : i32
    return %arg0, %c0_i32 : i32, i32
  }
  func.func @transform_2(%arg0: i32) -> i32 {
    %c0_i32 = arith.constant 0 : i32
    %c0_i32_0 = arith.constant 0 : i32
    return %c0_i32 : i32
  }
  func.func @transform_3(%arg0: i32) -> (i32, i32) {
    %c0_i32 = arith.constant 0 : i32
    %c0_i32_0 = arith.constant 0 : i32
    return %arg0, %c0_i32 : i32, i32
  }
  func.func @transform_4(%arg0: i32) -> (i32, i32) {
    %c0_i32 = arith.constant 0 : i32
    %c0_i32_0 = arith.constant 0 : i32
    return %arg0, %c0_i32 : i32, i32
  }
  func.func @transform_5(%arg0: i32) -> (i32, i32) {
    %c0_i32 = arith.constant 0 : i32
    %c0_i32_0 = arith.constant 0 : i32
    return %c0_i32, %arg0 : i32, i32
  }
}

</mosaic_0001>

<llo_original>
// kernel: tpu_custom_call.1
$region0: #{tpu_custom_call.1}
  #allocation0 [shape = 'u32[]', space=smem, size = 0x4, offset = 0x4, fixed_abs, tag = 'smem constant byte address 0x4 - core index']
  #allocation1 [shape = 'u32[144,128]{1,0:T(1,128)}', space=vmem, size = 0x12000, scoped, tag = 'internal scratch']
  #allocation2 [shape = 'f32[1]{0:T(128)S(6)}', space=smem, size = 0x200, scoped, tag = 'scoped memory for tpu_custom_call.1']
  %s0 = inlined_call_operand.vmem [shape: f32[128,32], index: 0, kind: input, shape index: {}]
  %s1 = inlined_call_operand.vmem [shape: f32[128,32], index: 1, kind: input, shape index: {}]
  %s2 = inlined_call_operand.<no memory space> [shape: f32[1], index: 2, kind: input, shape index: {}]
  %s3 = inlined_call_operand.vmem [shape: f32[128,32], index: 3, kind: output, shape index: {0}]
  %s4 = inlined_call_operand.vmem [shape: f32[128,32], index: 4, kind: output, shape index: {1}]
  %s5 = inlined_call_operand.hbm [shape: f32[8,128], index: 5, kind: output, shape index: {2}]
  %6 = xla_tuple %s3, %s4, %s5
  %s7 = sld [smem:[#allocation0]]
  $region38: #{tpu_custom_call.1} parent=0
    _
  %s9 = ssub.s32 1, %s7
  %s10 = scalar_select 0, %s9, %s7
  %11 = sst [smem:[#allocation2]] %s2
  $region1: #{tpu_custom_call.1} parent=0
    #allocation3 [shape = 'u8[4096]{0}', space=vmem, size = 0x1000, scoped, tag = 'output window, operand 2, single buffered']
    #allocation4 [shape = 's32[1]{0}', space=sflag, size = 0x4, scoped, tag = 'scoped memory for tpu_custom_call.1']
    %12 = vsyncpa [#allocation4], 0
    // Predicated region
    $region2: #{tpu_custom_call.1} parent=1 // pred_check
      _
    $region3: #{tpu_custom_call.1} parent=1 // pred_check_branch
      %14 = sbr.rel (0) target = $region5
    $region4: #{tpu_custom_call.1} parent=1 // pred_region
      _
    $region5: #{tpu_custom_call.1} parent=1 // pred_fallthru
      _
    // Predicated region
    $region6: #{tpu_custom_call.1} parent=1 // pred_check
      _
    $region7: #{tpu_custom_call.1} parent=1 // pred_check_branch
      %16 = sbr.rel (0) target = $region9
    $region8: #{tpu_custom_call.1} parent=1 // pred_region
      _
    $region9: #{tpu_custom_call.1} parent=1 // pred_fallthru
      _
    // Predicated region
    $region10: #{tpu_custom_call.1} parent=1 // pred_check
      _
    $region11: #{tpu_custom_call.1} parent=1 // pred_check_branch
      %18 = sbr.rel (0) target = $region13
    $region12: #{tpu_custom_call.1} parent=1 // pred_region
      _
    $region13: #{tpu_custom_call.1} parent=1 // pred_fallthru
      _
    %s19 = sld [smem:[#allocation2]]
    %v20 = vstv %s19
    %v21 = vrsqrt.pop %v20
    %v22 = vmul.f32 %v20, %v21
    %vm23 = vcmp.eq.f32.partialorder %v20, inf
    %v24 = vsel %vm23, %v20, %v22
    %vm25 = vcmp.eq.f32.partialorder %v20, 0.0
    %v26 = vand.u32 %v20, 2147483648
    %v27 = vsel %vm25, %v26, %v24
    %s28 = vtos %v27
    %v29 = vld [vmem:[%s0] sm:$0xff]
    %v30 = vld [vmem:[%s0 + $0x8] sm:$0xff]
    %v31 = vld [vmem:[%s0 + $0x10] sm:$0xff]
    %v32 = vld [vmem:[%s0 + $0x18] sm:$0xff]
    %v33 = vld [vmem:[%s0 + $0x20] sm:$0xff]
    %v34 = vld [vmem:[%s0 + $0x28] sm:$0xff]
    %v35 = vld [vmem:[%s0 + $0x30] sm:$0xff]
    %v36 = vld [vmem:[%s0 + $0x38] sm:$0xff]
    %v37 = vld [vmem:[%s0 + $0x40] sm:$0xff]
    %v38 = vld [vmem:[%s0 + $0x48] sm:$0xff]
    %v39 = vld [vmem:[%s0 + $0x50] sm:$0xff]
    %v40 = vld [vmem:[%s0 + $0x58] sm:$0xff]
    %v41 = vld [vmem:[%s0 + $0x60] sm:$0xff]
    %v42 = vld [vmem:[%s0 + $0x68] sm:$0xff]
    %v43 = vld [vmem:[%s0 + $0x70] sm:$0xff]
    %v44 = vld [vmem:[%s0 + $0x78] sm:$0xff]
    %v45 = vld [vmem:[%s1] sm:$0xff]
    %v46 = vld [vmem:[%s1 + $0x8] sm:$0xff]
    %v47 = vld [vmem:[%s1 + $0x10] sm:$0xff]
    %v48 = vld [vmem:[%s1 + $0x18] sm:$0xff]
    %v49 = vld [vmem:[%s1 + $0x20] sm:$0xff]
    %v50 = vld [vmem:[%s1 + $0x28] sm:$0xff]
    %v51 = vld [vmem:[%s1 + $0x30] sm:$0xff]
    %v52 = vld [vmem:[%s1 + $0x38] sm:$0xff]
    %v53 = vld [vmem:[%s1 + $0x40] sm:$0xff]
    %v54 = vld [vmem:[%s1 + $0x48] sm:$0xff]
    %v55 = vld [vmem:[%s1 + $0x50] sm:$0xff]
    %v56 = vld [vmem:[%s1 + $0x58] sm:$0xff]
    %v57 = vld [vmem:[%s1 + $0x60] sm:$0xff]
    %v58 = vld [vmem:[%s1 + $0x68] sm:$0xff]
    %v59 = vld [vmem:[%s1 + $0x70] sm:$0xff]
    %v60 = vld [vmem:[%s1 + $0x78] sm:$0xff]
    %v61 = vmul.f32 %v45, %v45
    %v62 = vmul.f32 %v46, %v46
    %v63 = vmul.f32 %v47, %v47
    %v64 = vmul.f32 %v48, %v48
    %v65 = vmul.f32 %v49, %v49
    %v66 = vmul.f32 %v50, %v50
    %v67 = vmul.f32 %v51, %v51
    %v68 = vmul.f32 %v52, %v52
    %v69 = vmul.f32 %v53, %v53
    %v70 = vmul.f32 %v54, %v54
    %v71 = vmul.f32 %v55, %v55
    %v72 = vmul.f32 %v56, %v56
    %v73 = vmul.f32 %v57, %v57
    %v74 = vmul.f32 %v58, %v58
    %v75 = vmul.f32 %v59, %v59
    %v76 = vmul.f32 %v60, %v60
    %vm77 = vcmask 261120
    %v78 = vsel %vm77, %v61, 0.0
    %79 = vadd.xlane.f32.xlu0 %v78
    %v80 = vpop.xlane.xlu0 %79
    %v81 = vsel %vm77, %v62, 0.0
    %82 = vadd.xlane.f32.xlu0 %v81
    %v83 = vpop.xlane.xlu0 %82
    %v84 = vsel %vm77, %v63, 0.0
    %85 = vadd.xlane.f32.xlu0 %v84
    %v86 = vpop.xlane.xlu0 %85
    %v87 = vsel %vm77, %v64, 0.0
    %88 = vadd.xlane.f32.xlu0 %v87
    %v89 = vpop.xlane.xlu0 %88
    %v90 = vsel %vm77, %v65, 0.0
    %91 = vadd.xlane.f32.xlu0 %v90
    %v92 = vpop.xlane.xlu0 %91
    %v93 = vsel %vm77, %v66, 0.0
    %94 = vadd.xlane.f32.xlu0 %v93
    %v95 = vpop.xlane.xlu0 %94
    %v96 = vsel %vm77, %v67, 0.0
    %97 = vadd.xlane.f32.xlu0 %v96
    %v98 = vpop.xlane.xlu0 %97
    %v99 = vsel %vm77, %v68, 0.0
    %100 = vadd.xlane.f32.xlu0 %v99
    %v101 = vpop.xlane.xlu0 %100
    %v102 = vsel %vm77, %v69, 0.0
    %103 = vadd.xlane.f32.xlu0 %v102
    %v104 = vpop.xlane.xlu0 %103
    %v105 = vsel %vm77, %v70, 0.0
    %106 = vadd.xlane.f32.xlu0 %v105
    %v107 = vpop.xlane.xlu0 %106
    %v108 = vsel %vm77, %v71, 0.0
    %109 = vadd.xlane.f32.xlu0 %v108
    %v110 = vpop.xlane.xlu0 %109
    %v111 = vsel %vm77, %v72, 0.0
    %112 = vadd.xlane.f32.xlu0 %v111
    %v113 = vpop.xlane.xlu0 %112
    %v114 = vsel %vm77, %v73, 0.0
    %115 = vadd.xlane.f32.xlu0 %v114
    %v116 = vpop.xlane.xlu0 %115
    %v117 = vsel %vm77, %v74, 0.0
    %118 = vadd.xlane.f32.xlu0 %v117
    %v119 = vpop.xlane.xlu0 %118
    %v120 = vsel %vm77, %v75, 0.0
    %121 = vadd.xlane.f32.xlu0 %v120
    %v122 = vpop.xlane.xlu0 %121
    %v123 = vsel %vm77, %v76, 0.0
    %124 = vadd.xlane.f32.xlu0 %v123
    %v125 = vpop.xlane.xlu0 %124
    %v126 = vrsqrt.pop %v80
    %v127 = vmul.f32 %v80, %v126
    %vm128 = vcmp.eq.f32.partialorder %v80, inf
    %v129 = vsel %vm128, %v80, %v127
    %vm130 = vcmp.eq.f32.partialorder %v80, 0.0
    %v131 = vand.u32 %v80, 2147483648
    %v132 = vsel %vm130, %v131, %v129
    %v133 = vrsqrt.pop %v83
    %v134 = vmul.f32 %v83, %v133
    %vm135 = vcmp.eq.f32.partialorder %v83, inf
    %v136 = vsel %vm135, %v83, %v134
    %vm137 = vcmp.eq.f32.partialorder %v83, 0.0
    %v138 = vand.u32 %v83, 2147483648
    %v139 = vsel %vm137, %v138, %v136
    %v140 = vrsqrt.pop %v86
    %v141 = vmul.f32 %v86, %v140
    %vm142 = vcmp.eq.f32.partialorder %v86, inf
    %v143 = vsel %vm142, %v86, %v141
    %vm144 = vcmp.eq.f32.partialorder %v86, 0.0
    %v145 = vand.u32 %v86, 2147483648
    %v146 = vsel %vm144, %v145, %v143
    %v147 = vrsqrt.pop %v89
    %v148 = vmul.f32 %v89, %v147
    %vm149 = vcmp.eq.f32.partialorder %v89, inf
    %v150 = vsel %vm149, %v89, %v148
    %vm151 = vcmp.eq.f32.partialorder %v89, 0.0
    %v152 = vand.u32 %v89, 2147483648
    %v153 = vsel %vm151, %v152, %v150
    %v154 = vrsqrt.pop %v92
    %v155 = vmul.f32 %v92, %v154
    %vm156 = vcmp.eq.f32.partialorder %v92, inf
    %v157 = vsel %vm156, %v92, %v155
    %vm158 = vcmp.eq.f32.partialorder %v92, 0.0
    %v159 = vand.u32 %v92, 2147483648
    %v160 = vsel %vm158, %v159, %v157
    %v161 = vrsqrt.pop %v95
    %v162 = vmul.f32 %v95, %v161
    %vm163 = vcmp.eq.f32.partialorder %v95, inf
    %v164 = vsel %vm163, %v95, %v162
    %vm165 = vcmp.eq.f32.partialorder %v95, 0.0
    %v166 = vand.u32 %v95, 2147483648
    %v167 = vsel %vm165, %v166, %v164
    %v168 = vrsqrt.pop %v98
    %v169 = vmul.f32 %v98, %v168
    %vm170 = vcmp.eq.f32.partialorder %v98, inf
    %v171 = vsel %vm170, %v98, %v169
    %vm172 = vcmp.eq.f32.partialorder %v98, 0.0
    %v173 = vand.u32 %v98, 2147483648
    %v174 = vsel %vm172, %v173, %v171
    %v175 = vrsqrt.pop %v101
    %v176 = vmul.f32 %v101, %v175
    %vm177 = vcmp.eq.f32.partialorder %v101, inf
    %v178 = vsel %vm177, %v101, %v176
    %vm179 = vcmp.eq.f32.partialorder %v101, 0.0
    %v180 = vand.u32 %v101, 2147483648
    %v181 = vsel %vm179, %v180, %v178
    %v182 = vrsqrt.pop %v104
    %v183 = vmul.f32 %v104, %v182
    %vm184 = vcmp.eq.f32.partialorder %v104, inf
    %v185 = vsel %vm184, %v104, %v183
    %vm186 = vcmp.eq.f32.partialorder %v104, 0.0
    %v187 = vand.u32 %v104, 2147483648
    %v188 = vsel %vm186, %v187, %v185
    %v189 = vrsqrt.pop %v107
    %v190 = vmul.f32 %v107, %v189
    %vm191 = vcmp.eq.f32.partialorder %v107, inf
    %v192 = vsel %vm191, %v107, %v190
    %vm193 = vcmp.eq.f32.partialorder %v107, 0.0
    %v194 = vand.u32 %v107, 2147483648
    %v195 = vsel %vm193, %v194, %v192
    %v196 = vrsqrt.pop %v110
    %v197 = vmul.f32 %v110, %v196
    %vm198 = vcmp.eq.f32.partialorder %v110, inf
    %v199 = vsel %vm198, %v110, %v197
    %vm200 = vcmp.eq.f32.partialorder %v110, 0.0
    %v201 = vand.u32 %v110, 2147483648
    %v202 = vsel %vm200, %v201, %v199
    %v203 = vrsqrt.pop %v113
    %v204 = vmul.f32 %v113, %v203
    %vm205 = vcmp.eq.f32.partialorder %v113, inf
    %v206 = vsel %vm205, %v113, %v204
    %vm207 = vcmp.eq.f32.partialorder %v113, 0.0
    %v208 = vand.u32 %v113, 2147483648
    %v209 = vsel %vm207, %v208, %v206
    %v210 = vrsqrt.pop %v116
    %v211 = vmul.f32 %v116, %v210
    %vm212 = vcmp.eq.f32.partialorder %v116, inf
    %v213 = vsel %vm212, %v116, %v211
    %vm214 = vcmp.eq.f32.partialorder %v116, 0.0
    %v215 = vand.u32 %v116, 2147483648
    %v216 = vsel %vm214, %v215, %v213
    %v217 = vrsqrt.pop %v119
    %v218 = vmul.f32 %v119, %v217
    %vm219 = vcmp.eq.f32.partialorder %v119, inf
    %v220 = vsel %vm219, %v119, %v218
    %vm221 = vcmp.eq.f32.partialorder %v119, 0.0
    %v222 = vand.u32 %v119, 2147483648
    %v223 = vsel %vm221, %v222, %v220
    %v224 = vrsqrt.pop %v122
    %v225 = vmul.f32 %v122, %v224
    %vm226 = vcmp.eq.f32.partialorder %v122, inf
    %v227 = vsel %vm226, %v122, %v225
    %vm228 = vcmp.eq.f32.partialorder %v122, 0.0
    %v229 = vand.u32 %v122, 2147483648
    %v230 = vsel %vm228, %v229, %v227
    %v231 = vrsqrt.pop %v125
    %v232 = vmul.f32 %v125, %v231
    %vm233 = vcmp.eq.f32.partialorder %v125, inf
    %v234 = vsel %vm233, %v125, %v232
    %vm235 = vcmp.eq.f32.partialorder %v125, 0.0
    %v236 = vand.u32 %v125, 2147483648
    %v237 = vsel %vm235, %v236, %v234
    %v238 = vmax.f32 %v132, 1e-05
    %v239 = vmax.f32 %v139, 1e-05
    %v240 = vmax.f32 %v146, 1e-05
    %v241 = vmax.f32 %v153, 1e-05
    %v242 = vmax.f32 %v160, 1e-05
    %v243 = vmax.f32 %v167, 1e-05
    %v244 = vmax.f32 %v174, 1e-05
    %v245 = vmax.f32 %v181, 1e-05
    %v246 = vmax.f32 %v188, 1e-05
    %v247 = vmax.f32 %v195, 1e-05
    %v248 = vmax.f32 %v202, 1e-05
    %v249 = vmax.f32 %v209, 1e-05
    %v250 = vmax.f32 %v216, 1e-05
    %v251 = vmax.f32 %v223, 1e-05
    %v252 = vmax.f32 %v230, 1e-05
    %v253 = vmax.f32 %v237, 1e-05
    %v254 = vstv %s28
    %v255 = vmul.f32 %v254, %v238
    %v256 = vmul.f32 %v254, %v239
    %v257 = vmul.f32 %v254, %v240
    %v258 = vmul.f32 %v254, %v241
    %v259 = vmul.f32 %v254, %v242
    %v260 = vmul.f32 %v254, %v243
    %v261 = vmul.f32 %v254, %v244
    %v262 = vmul.f32 %v254, %v245
    %v263 = vmul.f32 %v254, %v246
    %v264 = vmul.f32 %v254, %v247
    %v265 = vmul.f32 %v254, %v248
    %v266 = vmul.f32 %v254, %v249
    %v267 = vmul.f32 %v254, %v250
    %v268 = vmul.f32 %v254, %v251
    %v269 = vmul.f32 %v254, %v252
    %v270 = vmul.f32 %v254, %v253
    %v271 = vtanh.pop %v255
    %v272 = vtanh.pop %v256
    %v273 = vtanh.pop %v257
    %v274 = vtanh.pop %v258
    %v275 = vtanh.pop %v259
    %v276 = vtanh.pop %v260
    %v277 = vtanh.pop %v261
    %v278 = vtanh.pop %v262
    %v279 = vtanh.pop %v263
    %v280 = vtanh.pop %v264
    %v281 = vtanh.pop %v265
    %v282 = vtanh.pop %v266
    %v283 = vtanh.pop %v267
    %v284 = vtanh.pop %v268
    %v285 = vtanh.pop %v269
    %v286 = vtanh.pop %v270
    %v287 = vmul.f32 %v271, %v45
    %v288 = vmul.f32 %v272, %v46
    %v289 = vmul.f32 %v273, %v47
    %v290 = vmul.f32 %v274, %v48
    %v291 = vmul.f32 %v275, %v49
    %v292 = vmul.f32 %v276, %v50
    %v293 = vmul.f32 %v277, %v51
    %v294 = vmul.f32 %v278, %v52
    %v295 = vmul.f32 %v279, %v53
    %v296 = vmul.f32 %v280, %v54
    %v297 = vmul.f32 %v281, %v55
    %v298 = vmul.f32 %v282, %v56
    %v299 = vmul.f32 %v283, %v57
    %v300 = vmul.f32 %v284, %v58
    %v301 = vmul.f32 %v285, %v59
    %v302 = vmul.f32 %v286, %v60
    %v303 = vrcp.pop %v255
    %v304 = vmul.f32 %v287, %v303
    %v305 = vrcp.pop %v256
    %v306 = vmul.f32 %v288, %v305
    %v307 = vrcp.pop %v257
    %v308 = vmul.f32 %v289, %v307
    %v309 = vrcp.pop %v258
    %v310 = vmul.f32 %v290, %v309
    %v311 = vrcp.pop %v259
    %v312 = vmul.f32 %v291, %v311
    %v313 = vrcp.pop %v260
    %v314 = vmul.f32 %v292, %v313
    %v315 = vrcp.pop %v261
    %v316 = vmul.f32 %v293, %v315
    %v317 = vrcp.pop %v262
    %v318 = vmul.f32 %v294, %v317
    %v319 = vrcp.pop %v263
    %v320 = vmul.f32 %v295, %v319
    %v321 = vrcp.pop %v264
    %v322 = vmul.f32 %v296, %v321
    %v323 = vrcp.pop %v265
    %v324 = vmul.f32 %v297, %v323
    %v325 = vrcp.pop %v266
    %v326 = vmul.f32 %v298, %v325
    %v327 = vrcp.pop %v267
    %v328 = vmul.f32 %v299, %v327
    %v329 = vrcp.pop %v268
    %v330 = vmul.f32 %v300, %v329
    %v331 = vrcp.pop %v269
    %v332 = vmul.f32 %v301, %v331
    %v333 = vrcp.pop %v270
    %v334 = vmul.f32 %v302, %v333
    %v335 = vmul.f32 %v304, %v304
    %v336 = vmul.f32 %v306, %v306
    %v337 = vmul.f32 %v308, %v308
    %v338 = vmul.f32 %v310, %v310
    %v339 = vmul.f32 %v312, %v312
    %v340 = vmul.f32 %v314, %v314
    %v341 = vmul.f32 %v316, %v316
    %v342 = vmul.f32 %v318, %v318
    %v343 = vmul.f32 %v320, %v320
    %v344 = vmul.f32 %v322, %v322
    %v345 = vmul.f32 %v324, %v324
    %v346 = vmul.f32 %v326, %v326
    %v347 = vmul.f32 %v328, %v328
    %v348 = vmul.f32 %v330, %v330
    %v349 = vmul.f32 %v332, %v332
    %v350 = vmul.f32 %v334, %v334
    %v351 = vsel %vm77, %v335, 0.0
    %352 = vadd.xlane.f32.xlu0 %v351
    %v353 = vpop.xlane.xlu0 %352
    %v354 = vsel %vm77, %v336, 0.0
    %355 = vadd.xlane.f32.xlu0 %v354
    %v356 = vpop.xlane.xlu0 %355
    %v357 = vsel %vm77, %v337, 0.0
    %358 = vadd.xlane.f32.xlu0 %v357
    %v359 = vpop.xlane.xlu0 %358
    %v360 = vsel %vm77, %v338, 0.0
    %361 = vadd.xlane.f32.xlu0 %v360
    %v362 = vpop.xlane.xlu0 %361
    %v363 = vsel %vm77, %v339, 0.0
    %364 = vadd.xlane.f32.xlu0 %v363
    %v365 = vpop.xlane.xlu0 %364
    %v366 = vsel %vm77, %v340, 0.0
    %367 = vadd.xlane.f32.xlu0 %v366
    %v368 = vpop.xlane.xlu0 %367
    %v369 = vsel %vm77, %v341, 0.0
    %370 = vadd.xlane.f32.xlu0 %v369
    %v371 = vpop.xlane.xlu0 %370
    %v372 = vsel %vm77, %v342, 0.0
    %373 = vadd.xlane.f32.xlu0 %v372
    %v374 = vpop.xlane.xlu0 %373
    %v375 = vsel %vm77, %v343, 0.0
    %376 = vadd.xlane.f32.xlu0 %v375
    %v377 = vpop.xlane.xlu0 %376
    %v378 = vsel %vm77, %v344, 0.0
    %379 = vadd.xlane.f32.xlu0 %v378
    %v380 = vpop.xlane.xlu0 %379
    %v381 = vsel %vm77, %v345, 0.0
    %382 = vadd.xlane.f32.xlu0 %v381
    %v383 = vpop.xlane.xlu0 %382
    %v384 = vsel %vm77, %v346, 0.0
    %385 = vadd.xlane.f32.xlu0 %v384
    %v386 = vpop.xlane.xlu0 %385
    %v387 = vsel %vm77, %v347, 0.0
    %388 = vadd.xlane.f32.xlu0 %v387
    %v389 = vpop.xlane.xlu0 %388
    %v390 = vsel %vm77, %v348, 0.0
    %391 = vadd.xlane.f32.xlu0 %v390
    %v392 = vpop.xlane.xlu0 %391
    %v393 = vsel %vm77, %v349, 0.0
    %394 = vadd.xlane.f32.xlu0 %v393
    %v395 = vpop.xlane.xlu0 %394
    %v396 = vsel %vm77, %v350, 0.0
    %397 = vadd.xlane.f32.xlu0 %v396
    %v398 = vpop.xlane.xlu0 %397
    %v399 = vstv %s19
    %v400 = vmul.f32 %v399, %v353
    %v401 = vmul.f32 %v399, %v356
    %v402 = vmul.f32 %v399, %v359
    %v403 = vmul.f32 %v399, %v362
    %v404 = vmul.f32 %v399, %v365
    %v405 = vmul.f32 %v399, %v368
    %v406 = vmul.f32 %v399, %v371
    %v407 = vmul.f32 %v399, %v374
    %v408 = vmul.f32 %v399, %v377
    %v409 = vmul.f32 %v399, %v380
    %v410 = vmul.f32 %v399, %v383
    %v411 = vmul.f32 %v399, %v386
    %v412 = vmul.f32 %v399, %v389
    %v413 = vmul.f32 %v399, %v392
    %v414 = vmul.f32 %v399, %v395
    %v415 = vmul.f32 %v399, %v398
    %v416 = vadd.f32 %v400, 1.0
    %v417 = vadd.f32 %v401, 1.0
    %v418 = vadd.f32 %v402, 1.0
    %v419 = vadd.f32 %v403, 1.0
    %v420 = vadd.f32 %v404, 1.0
    %v421 = vadd.f32 %v405, 1.0
    %v422 = vadd.f32 %v406, 1.0
    %v423 = vadd.f32 %v407, 1.0
    %v424 = vadd.f32 %v408, 1.0
    %v425 = vadd.f32 %v409, 1.0
    %v426 = vadd.f32 %v410, 1.0
    %v427 = vadd.f32 %v411, 1.0
    %v428 = vadd.f32 %v412, 1.0
    %v429 = vadd.f32 %v413, 1.0
    %v430 = vadd.f32 %v414, 1.0
    %v431 = vadd.f32 %v415, 1.0
    %v432 = vmul.f32 %v29, %v416
    %v433 = vmul.f32 %v30, %v417
    %v434 = vmul.f32 %v31, %v418
    %v435 = vmul.f32 %v32, %v419
    %v436 = vmul.f32 %v33, %v420
    %v437 = vmul.f32 %v34, %v421
    %v438 = vmul.f32 %v35, %v422
    %v439 = vmul.f32 %v36, %v423
    %v440 = vmul.f32 %v37, %v424
    %v441 = vmul.f32 %v38, %v425
    %v442 = vmul.f32 %v39, %v426
    %v443 = vmul.f32 %v40, %v427
    %v444 = vmul.f32 %v41, %v428
    %v445 = vmul.f32 %v42, %v429
    %v446 = vmul.f32 %v43, %v430
    %v447 = vmul.f32 %v44, %v431
    %v448 = vmul.f32 %v432, %v432
    %v449 = vmul.f32 %v433, %v433
    %v450 = vmul.f32 %v434, %v434
    %v451 = vmul.f32 %v435, %v435
    %v452 = vmul.f32 %v436, %v436
    %v453 = vmul.f32 %v437, %v437
    %v454 = vmul.f32 %v438, %v438
    %v455 = vmul.f32 %v439, %v439
    %v456 = vmul.f32 %v440, %v440
    %v457 = vmul.f32 %v441, %v441
    %v458 = vmul.f32 %v442, %v442
    %v459 = vmul.f32 %v443, %v443
    %v460 = vmul.f32 %v444, %v444
    %v461 = vmul.f32 %v445, %v445
    %v462 = vmul.f32 %v446, %v446
    %v463 = vmul.f32 %v447, %v447
    %v464 = vsel %vm77, %v448, 0.0
    %465 = vadd.xlane.f32.xlu0 %v464
    %v466 = vpop.xlane.xlu0 %465
    %v467 = vsel %vm77, %v449, 0.0
    %468 = vadd.xlane.f32.xlu0 %v467
    %v469 = vpop.xlane.xlu0 %468
    %v470 = vsel %vm77, %v450, 0.0
    %471 = vadd.xlane.f32.xlu0 %v470
    %v472 = vpop.xlane.xlu0 %471
    %v473 = vsel %vm77, %v451, 0.0
    %474 = vadd.xlane.f32.xlu0 %v473
    %v475 = vpop.xlane.xlu0 %474
    %v476 = vsel %vm77, %v452, 0.0
    %477 = vadd.xlane.f32.xlu0 %v476
    %v478 = vpop.xlane.xlu0 %477
    %v479 = vsel %vm77, %v453, 0.0
    %480 = vadd.xlane.f32.xlu0 %v479
    %v481 = vpop.xlane.xlu0 %480
    %v482 = vsel %vm77, %v454, 0.0
    %483 = vadd.xlane.f32.xlu0 %v482
    %v484 = vpop.xlane.xlu0 %483
    %v485 = vsel %vm77, %v455, 0.0
    %486 = vadd.xlane.f32.xlu0 %v485
    %v487 = vpop.xlane.xlu0 %486
    %v488 = vsel %vm77, %v456, 0.0
    %489 = vadd.xlane.f32.xlu0 %v488
    %v490 = vpop.xlane.xlu0 %489
    %v491 = vsel %vm77, %v457, 0.0
    %492 = vadd.xlane.f32.xlu0 %v491
    %v493 = vpop.xlane.xlu0 %492
    %v494 = vsel %vm77, %v458, 0.0
    %495 = vadd.xlane.f32.xlu0 %v494
    %v496 = vpop.xlane.xlu0 %495
    %v497 = vsel %vm77, %v459, 0.0
    %498 = vadd.xlane.f32.xlu0 %v497
    %v499 = vpop.xlane.xlu0 %498
    %v500 = vsel %vm77, %v460, 0.0
    %501 = vadd.xlane.f32.xlu0 %v500
    %v502 = vpop.xlane.xlu0 %501
    %v503 = vsel %vm77, %v461, 0.0
    %504 = vadd.xlane.f32.xlu0 %v503
    %v505 = vpop.xlane.xlu0 %504
    %v506 = vsel %vm77, %v462, 0.0
    %507 = vadd.xlane.f32.xlu0 %v506
    %v508 = vpop.xlane.xlu0 %507
    %v509 = vsel %vm77, %v463, 0.0
    %510 = vadd.xlane.f32.xlu0 %v509
    %v511 = vpop.xlane.xlu0 %510
    %v512 = vrsqrt.pop %v466
    %v513 = vmul.f32 %v466, %v512
    %vm514 = vcmp.eq.f32.partialorder %v466, inf
    %v515 = vsel %vm514, %v466, %v513
    %vm516 = vcmp.eq.f32.partialorder %v466, 0.0
    %v517 = vand.u32 %v466, 2147483648
    %v518 = vsel %vm516, %v517, %v515
    %v519 = vrsqrt.pop %v469
    %v520 = vmul.f32 %v469, %v519
    %vm521 = vcmp.eq.f32.partialorder %v469, inf
    %v522 = vsel %vm521, %v469, %v520
    %vm523 = vcmp.eq.f32.partialorder %v469, 0.0
    %v524 = vand.u32 %v469, 2147483648
    %v525 = vsel %vm523, %v524, %v522
    %v526 = vrsqrt.pop %v472
    %v527 = vmul.f32 %v472, %v526
    %vm528 = vcmp.eq.f32.partialorder %v472, inf
    %v529 = vsel %vm528, %v472, %v527
    %vm530 = vcmp.eq.f32.partialorder %v472, 0.0
    %v531 = vand.u32 %v472, 2147483648
    %v532 = vsel %vm530, %v531, %v529
    %v533 = vrsqrt.pop %v475
    %v534 = vmul.f32 %v475, %v533
    %vm535 = vcmp.eq.f32.partialorder %v475, inf
    %v536 = vsel %vm535, %v475, %v534
    %vm537 = vcmp.eq.f32.partialorder %v475, 0.0
    %v538 = vand.u32 %v475, 2147483648
    %v539 = vsel %vm537, %v538, %v536
    %v540 = vrsqrt.pop %v478
    %v541 = vmul.f32 %v478, %v540
    %vm542 = vcmp.eq.f32.partialorder %v478, inf
    %v543 = vsel %vm542, %v478, %v541
    %vm544 = vcmp.eq.f32.partialorder %v478, 0.0
    %v545 = vand.u32 %v478, 2147483648
    %v546 = vsel %vm544, %v545, %v543
    %v547 = vrsqrt.pop %v481
    %v548 = vmul.f32 %v481, %v547
    %vm549 = vcmp.eq.f32.partialorder %v481, inf
    %v550 = vsel %vm549, %v481, %v548
    %vm551 = vcmp.eq.f32.partialorder %v481, 0.0
    %v552 = vand.u32 %v481, 2147483648
    %v553 = vsel %vm551, %v552, %v550
    %v554 = vrsqrt.pop %v484
    %v555 = vmul.f32 %v484, %v554
    %vm556 = vcmp.eq.f32.partialorder %v484, inf
    %v557 = vsel %vm556, %v484, %v555
    %vm558 = vcmp.eq.f32.partialorder %v484, 0.0
    %v559 = vand.u32 %v484, 2147483648
    %v560 = vsel %vm558, %v559, %v557
    %v561 = vrsqrt.pop %v487
    %v562 = vmul.f32 %v487, %v561
    %vm563 = vcmp.eq.f32.partialorder %v487, inf
    %v564 = vsel %vm563, %v487, %v562
    %vm565 = vcmp.eq.f32.partialorder %v487, 0.0
    %v566 = vand.u32 %v487, 2147483648
    %v567 = vsel %vm565, %v566, %v564
    %v568 = vrsqrt.pop %v490
    %v569 = vmul.f32 %v490, %v568
    %vm570 = vcmp.eq.f32.partialorder %v490, inf
    %v571 = vsel %vm570, %v490, %v569
    %vm572 = vcmp.eq.f32.partialorder %v490, 0.0
    %v573 = vand.u32 %v490, 2147483648
    %v574 = vsel %vm572, %v573, %v571
    %v575 = vrsqrt.pop %v493
    %v576 = vmul.f32 %v493, %v575
    %vm577 = vcmp.eq.f32.partialorder %v493, inf
    %v578 = vsel %vm577, %v493, %v576
    %vm579 = vcmp.eq.f32.partialorder %v493, 0.0
    %v580 = vand.u32 %v493, 2147483648
    %v581 = vsel %vm579, %v580, %v578
    %v582 = vrsqrt.pop %v496
    %v583 = vmul.f32 %v496, %v582
    %vm584 = vcmp.eq.f32.partialorder %v496, inf
    %v585 = vsel %vm584, %v496, %v583
    %vm586 = vcmp.eq.f32.partialorder %v496, 0.0
    %v587 = vand.u32 %v496, 2147483648
    %v588 = vsel %vm586, %v587, %v585
    %v589 = vrsqrt.pop %v499
    %v590 = vmul.f32 %v499, %v589
    %vm591 = vcmp.eq.f32.partialorder %v499, inf
    %v592 = vsel %vm591, %v499, %v590
    %vm593 = vcmp.eq.f32.partialorder %v499, 0.0
    %v594 = vand.u32 %v499, 2147483648
    %v595 = vsel %vm593, %v594, %v592
    %v596 = vrsqrt.pop %v502
    %v597 = vmul.f32 %v502, %v596
    %vm598 = vcmp.eq.f32.partialorder %v502, inf
    %v599 = vsel %vm598, %v502, %v597
    %vm600 = vcmp.eq.f32.partialorder %v502, 0.0
    %v601 = vand.u32 %v502, 2147483648
    %v602 = vsel %vm600, %v601, %v599
    %v603 = vrsqrt.pop %v505
    %v604 = vmul.f32 %v505, %v603
    %vm605 = vcmp.eq.f32.partialorder %v505, inf
    %v606 = vsel %vm605, %v505, %v604
    %vm607 = vcmp.eq.f32.partialorder %v505, 0.0
    %v608 = vand.u32 %v505, 2147483648
    %v609 = vsel %vm607, %v608, %v606
    %v610 = vrsqrt.pop %v508
    %v611 = vmul.f32 %v508, %v610
    %vm612 = vcmp.eq.f32.partialorder %v508, inf
    %v613 = vsel %vm612, %v508, %v611
    %vm614 = vcmp.eq.f32.partialorder %v508, 0.0
    %v615 = vand.u32 %v508, 2147483648
    %v616 = vsel %vm614, %v615, %v613
    %v617 = vrsqrt.pop %v511
    %v618 = vmul.f32 %v511, %v617
    %vm619 = vcmp.eq.f32.partialorder %v511, inf
    %v620 = vsel %vm619, %v511, %v618
    %vm621 = vcmp.eq.f32.partialorder %v511, 0.0
    %v622 = vand.u32 %v511, 2147483648
    %v623 = vsel %vm621, %v622, %v620
    %v624 = vmul.f32 %v304, %v432
    %v625 = vmul.f32 %v306, %v433
    %v626 = vmul.f32 %v308, %v434
    %v627 = vmul.f32 %v310, %v435
    %v628 = vmul.f32 %v312, %v436
    %v629 = vmul.f32 %v314, %v437
    %v630 = vmul.f32 %v316, %v438
    %v631 = vmul.f32 %v318, %v439
    %v632 = vmul.f32 %v320, %v440
    %v633 = vmul.f32 %v322, %v441
    %v634 = vmul.f32 %v324, %v442
    %v635 = vmul.f32 %v326, %v443
    %v636 = vmul.f32 %v328, %v444
    %v637 = vmul.f32 %v330, %v445
    %v638 = vmul.f32 %v332, %v446
    %v639 = vmul.f32 %v334, %v447
    %v640 = vsel %vm77, %v624, 0.0
    %641 = vadd.xlane.f32.xlu0 %v640
    %v642 = vpop.xlane.xlu0 %641
    %v643 = vsel %vm77, %v625, 0.0
    %644 = vadd.xlane.f32.xlu0 %v643
    %v645 = vpop.xlane.xlu0 %644
    %v646 = vsel %vm77, %v626, 0.0
    %647 = vadd.xlane.f32.xlu0 %v646
    %v648 = vpop.xlane.xlu0 %647
    %v649 = vsel %vm77, %v627, 0.0
    %650 = vadd.xlane.f32.xlu0 %v649
    %v651 = vpop.xlane.xlu0 %650
    %v652 = vsel %vm77, %v628, 0.0
    %653 = vadd.xlane.f32.xlu0 %v652
    %v654 = vpop.xlane.xlu0 %653
    %v655 = vsel %vm77, %v629, 0.0
    %656 = vadd.xlane.f32.xlu0 %v655
    %v657 = vpop.xlane.xlu0 %656
    %v658 = vsel %vm77, %v630, 0.0
    %659 = vadd.xlane.f32.xlu0 %v658
    %v660 = vpop.xlane.xlu0 %659
    %v661 = vsel %vm77, %v631, 0.0
    %662 = vadd.xlane.f32.xlu0 %v661
    %v663 = vpop.xlane.xlu0 %662
    %v664 = vsel %vm77, %v632, 0.0
    %665 = vadd.xlane.f32.xlu0 %v664
    %v666 = vpop.xlane.xlu0 %665
    %v667 = vsel %vm77, %v633, 0.0
    %668 = vadd.xlane.f32.xlu0 %v667
    %v669 = vpop.xlane.xlu0 %668
    %v670 = vsel %vm77, %v634, 0.0
    %671 = vadd.xlane.f32.xlu0 %v670
    %v672 = vpop.xlane.xlu0 %671
    %v673 = vsel %vm77, %v635, 0.0
    %674 = vadd.xlane.f32.xlu0 %v673
    %v675 = vpop.xlane.xlu0 %674
    %v676 = vsel %vm77, %v636, 0.0
    %677 = vadd.xlane.f32.xlu0 %v676
    %v678 = vpop.xlane.xlu0 %677
    %v679 = vsel %vm77, %v637, 0.0
    %680 = vadd.xlane.f32.xlu0 %v679
    %v681 = vpop.xlane.xlu0 %680
    %v682 = vsel %vm77, %v638, 0.0
    %683 = vadd.xlane.f32.xlu0 %v682
    %v684 = vpop.xlane.xlu0 %683
    %v685 = vsel %vm77, %v639, 0.0
    %686 = vadd.xlane.f32.xlu0 %v685
    %v687 = vpop.xlane.xlu0 %686
    %v688 = vsub.f32 1.0, %v400
    %v689 = vsub.f32 1.0, %v401
    %v690 = vsub.f32 1.0, %v402
    %v691 = vsub.f32 1.0, %v403
    %v692 = vsub.f32 1.0, %v404
    %v693 = vsub.f32 1.0, %v405
    %v694 = vsub.f32 1.0, %v406
    %v695 = vsub.f32 1.0, %v407
    %v696 = vsub.f32 1.0, %v408
    %v697 = vsub.f32 1.0, %v409
    %v698 = vsub.f32 1.0, %v410
    %v699 = vsub.f32 1.0, %v411
    %v700 = vsub.f32 1.0, %v412
    %v701 = vsub.f32 1.0, %v413
    %v702 = vsub.f32 1.0, %v414
    %v703 = vsub.f32 1.0, %v415
    %v704 = vrcp.pop %v688
    %v705 = vmul.f32 2.0, %v704
    %v706 = vrcp.pop %v689
    %v707 = vmul.f32 2.0, %v706
    %v708 = vrcp.pop %v690
    %v709 = vmul.f32 2.0, %v708
    %v710 = vrcp.pop %v691
    %v711 = vmul.f32 2.0, %v710
    %v712 = vrcp.pop %v692
    %v713 = vmul.f32 2.0, %v712
    %v714 = vrcp.pop %v693
    %v715 = vmul.f32 2.0, %v714
    %v716 = vrcp.pop %v694
    %v717 = vmul.f32 2.0, %v716
    %v718 = vrcp.pop %v695
    %v719 = vmul.f32 2.0, %v718
    %v720 = vrcp.pop %v696
    %v721 = vmul.f32 2.0, %v720
    %v722 = vrcp.pop %v697
    %v723 = vmul.f32 2.0, %v722
    %v724 = vrcp.pop %v698
    %v725 = vmul.f32 2.0, %v724
    %v726 = vrcp.pop %v699
    %v727 = vmul.f32 2.0, %v726
    %v728 = vrcp.pop %v700
    %v729 = vmul.f32 2.0, %v728
    %v730 = vrcp.pop %v701
    %v731 = vmul.f32 2.0, %v730
    %v732 = vrcp.pop %v702
    %v733 = vmul.f32 2.0, %v732
    %v734 = vrcp.pop %v703
    %v735 = vmul.f32 2.0, %v734
    %v736 = vmul.f32 %v705, %v518
    %v737 = vmul.f32 %v707, %v525
    %v738 = vmul.f32 %v709, %v532
    %v739 = vmul.f32 %v711, %v539
    %v740 = vmul.f32 %v713, %v546
    %v741 = vmul.f32 %v715, %v553
    %v742 = vmul.f32 %v717, %v560
    %v743 = vmul.f32 %v719, %v567
    %v744 = vmul.f32 %v721, %v574
    %v745 = vmul.f32 %v723, %v581
    %v746 = vmul.f32 %v725, %v588
    %v747 = vmul.f32 %v727, %v595
    %v748 = vmul.f32 %v729, %v602
    %v749 = vmul.f32 %v731, %v609
    %v750 = vmul.f32 %v733, %v616
    %v751 = vmul.f32 %v735, %v623
    %v752 = vrcp.pop %v254
    %v753 = vmul.f32 %v736, %v752
    %v754 = vmul.f32 %v737, %v752
    %v755 = vmul.f32 %v738, %v752
    %v756 = vmul.f32 %v739, %v752
    %v757 = vmul.f32 %v740, %v752
    %v758 = vmul.f32 %v741, %v752
    %v759 = vmul.f32 %v742, %v752
    %v760 = vmul.f32 %v743, %v752
    %v761 = vmul.f32 %v744, %v752
    %v762 = vmul.f32 %v745, %v752
    %v763 = vmul.f32 %v746, %v752
    %v764 = vmul.f32 %v747, %v752
    %v765 = vmul.f32 %v748, %v752
    %v766 = vmul.f32 %v749, %v752
    %v767 = vmul.f32 %v750, %v752
    %v768 = vmul.f32 %v751, %v752
    %769 = vst.msk [vmem:[%s3] sm:$0xff] %vm77, %v304
    %770 = vst.msk [vmem:[%s3 + $0x8] sm:$0xff] %vm77, %v306
    %771 = vst.msk [vmem:[%s3 + $0x10] sm:$0xff] %vm77, %v308
    %772 = vst.msk [vmem:[%s3 + $0x18] sm:$0xff] %vm77, %v310
    %773 = vst.msk [vmem:[%s3 + $0x20] sm:$0xff] %vm77, %v312
    %774 = vst.msk [vmem:[%s3 + $0x28] sm:$0xff] %vm77, %v314
    %775 = vst.msk [vmem:[%s3 + $0x30] sm:$0xff] %vm77, %v316
    %776 = vst.msk [vmem:[%s3 + $0x38] sm:$0xff] %vm77, %v318
    %777 = vst.msk [vmem:[%s3 + $0x40] sm:$0xff] %vm77, %v320
    %778 = vst.msk [vmem:[%s3 + $0x48] sm:$0xff] %vm77, %v322
    %779 = vst.msk [vmem:[%s3 + $0x50] sm:$0xff] %vm77, %v324
    %780 = vst.msk [vmem:[%s3 + $0x58] sm:$0xff] %vm77, %v326
    %781 = vst.msk [vmem:[%s3 + $0x60] sm:$0xff] %vm77, %v328
    %782 = vst.msk [vmem:[%s3 + $0x68] sm:$0xff] %vm77, %v330
    %783 = vst.msk [vmem:[%s3 + $0x70] sm:$0xff] %vm77, %v332
    %784 = vst.msk [vmem:[%s3 + $0x78] sm:$0xff] %vm77, %v334
    %785 = vst.msk [vmem:[%s4] sm:$0xff] %vm77, %v432
    %786 = vst.msk [vmem:[%s4 + $0x8] sm:$0xff] %vm77, %v433
    %787 = vst.msk [vmem:[%s4 + $0x10] sm:$0xff] %vm77, %v434
    %788 = vst.msk [vmem:[%s4 + $0x18] sm:$0xff] %vm77, %v435
    %789 = vst.msk [vmem:[%s4 + $0x20] sm:$0xff] %vm77, %v436
    %790 = vst.msk [vmem:[%s4 + $0x28] sm:$0xff] %vm77, %v437
    %791 = vst.msk [vmem:[%s4 + $0x30] sm:$0xff] %vm77, %v438
    %792 = vst.msk [vmem:[%s4 + $0x38] sm:$0xff] %vm77, %v439
    %793 = vst.msk [vmem:[%s4 + $0x40] sm:$0xff] %vm77, %v440
    %794 = vst.msk [vmem:[%s4 + $0x48] sm:$0xff] %vm77, %v441
    %795 = vst.msk [vmem:[%s4 + $0x50] sm:$0xff] %vm77, %v442
    %796 = vst.msk [vmem:[%s4 + $0x58] sm:$0xff] %vm77, %v443
    %797 = vst.msk [vmem:[%s4 + $0x60] sm:$0xff] %vm77, %v444
    %798 = vst.msk [vmem:[%s4 + $0x68] sm:$0xff] %vm77, %v445
    %799 = vst.msk [vmem:[%s4 + $0x70] sm:$0xff] %vm77, %v446
    %800 = vst.msk [vmem:[%s4 + $0x78] sm:$0xff] %vm77, %v447
    %801 = vxpose.xlu0.b32.start [1/16] %v353, 128
    %802 = vxpose.xlu0.b32.cont [2/16] %v356, 128
    %803 = vxpose.xlu0.b32.cont [3/16] %v359, 128
    %804 = vxpose.xlu0.b32.cont [4/16] %v362, 128
    %805 = vxpose.xlu0.b32.cont [5/16] %v365, 128
    %806 = vxpose.xlu0.b32.cont [6/16] %v368, 128
    %807 = vxpose.xlu0.b32.cont [7/16] %v371, 128
    %808 = vxpose.xlu0.b32.cont [8/16] %v374, 128
    %809 = vxpose.xlu0.b32.cont [9/16] %v377, 128
    %810 = vxpose.xlu0.b32.cont [10/16] %v380, 128
    %811 = vxpose.xlu0.b32.cont [11/16] %v383, 128
    %812 = vxpose.xlu0.b32.cont [12/16] %v386, 128
    %813 = vxpose.xlu0.b32.cont [13/16] %v389, 128
    %814 = vxpose.xlu0.b32.cont [14/16] %v392, 128
    %815 = vxpose.xlu0.b32.cont [15/16] %v395, 128
    %816 = vxpose.xlu0.b32.end [16/16] %v398, 128
    %v817 = vpop.trf.xlu0
    %v818 = vpop.trf.xlu0
    %v819 = vpop.trf.xlu0
    %v820 = vpop.trf.xlu0
    %v821 = vpop.trf.xlu0
    %v822 = vpop.trf.xlu0
    %v823 = vpop.trf.xlu0
    %v824 = vpop.trf.xlu0
    %v825 = vpop.trf.xlu0
    %v826 = vpop.trf.xlu0
    %v827 = vpop.trf.xlu0
    %v828 = vpop.trf.xlu0
    %v829 = vpop.trf.xlu0
    %v830 = vpop.trf.xlu0
    %v831 = vpop.trf.xlu0
    %v832 = vpop.trf.xlu0
    %833 = vxpose.xlu0.b32.start [1/16] %v642, 128
    %834 = vxpose.xlu0.b32.cont [2/16] %v645, 128
    %835 = vxpose.xlu0.b32.cont [3/16] %v648, 128
    %836 = vxpose.xlu0.b32.cont [4/16] %v651, 128
    %837 = vxpose.xlu0.b32.cont [5/16] %v654, 128
    %838 = vxpose.xlu0.b32.cont [6/16] %v657, 128
    %839 = vxpose.xlu0.b32.cont [7/16] %v660, 128
    %840 = vxpose.xlu0.b32.cont [8/16] %v663, 128
    %841 = vxpose.xlu0.b32.cont [9/16] %v666, 128
    %842 = vxpose.xlu0.b32.cont [10/16] %v669, 128
    %843 = vxpose.xlu0.b32.cont [11/16] %v672, 128
    %844 = vxpose.xlu0.b32.cont [12/16] %v675, 128
    %845 = vxpose.xlu0.b32.cont [13/16] %v678, 128
    %846 = vxpose.xlu0.b32.cont [14/16] %v681, 128
    %847 = vxpose.xlu0.b32.cont [15/16] %v684, 128
    %848 = vxpose.xlu0.b32.end [16/16] %v687, 128
    %v849 = vpop.trf.xlu0
    %v850 = vpop.trf.xlu0
    %v851 = vpop.trf.xlu0
    %v852 = vpop.trf.xlu0
    %v853 = vpop.trf.xlu0
    %v854 = vpop.trf.xlu0
    %v855 = vpop.trf.xlu0
    %v856 = vpop.trf.xlu0
    %v857 = vpop.trf.xlu0
    %v858 = vpop.trf.xlu0
    %v859 = vpop.trf.xlu0
    %v860 = vpop.trf.xlu0
    %v861 = vpop.trf.xlu0
    %v862 = vpop.trf.xlu0
    %v863 = vpop.trf.xlu0
    %v864 = vpop.trf.xlu0
    %865 = vxpose.xlu0.b32.start [1/16] %v518, 128
    %866 = vxpose.xlu0.b32.cont [2/16] %v525, 128
    %867 = vxpose.xlu0.b32.cont [3/16] %v532, 128
    %868 = vxpose.xlu0.b32.cont [4/16] %v539, 128
    %869 = vxpose.xlu0.b32.cont [5/16] %v546, 128
    %870 = vxpose.xlu0.b32.cont [6/16] %v553, 128
    %871 = vxpose.xlu0.b32.cont [7/16] %v560, 128
    %872 = vxpose.xlu0.b32.cont [8/16] %v567, 128
    %873 = vxpose.xlu0.b32.cont [9/16] %v574, 128
    %874 = vxpose.xlu0.b32.cont [10/16] %v581, 128
    %875 = vxpose.xlu0.b32.cont [11/16] %v588, 128
    %876 = vxpose.xlu0.b32.cont [12/16] %v595, 128
    %877 = vxpose.xlu0.b32.cont [13/16] %v602, 128
    %878 = vxpose.xlu0.b32.cont [14/16] %v609, 128
    %879 = vxpose.xlu0.b32.cont [15/16] %v616, 128
    %880 = vxpose.xlu0.b32.end [16/16] %v623, 128
    %v881 = vpop.trf.xlu0
    %v882 = vpop.trf.xlu0
    %v883 = vpop.trf.xlu0
    %v884 = vpop.trf.xlu0
    %v885 = vpop.trf.xlu0
    %v886 = vpop.trf.xlu0
    %v887 = vpop.trf.xlu0
    %v888 = vpop.trf.xlu0
    %v889 = vpop.trf.xlu0
    %v890 = vpop.trf.xlu0
    %v891 = vpop.trf.xlu0
    %v892 = vpop.trf.xlu0
    %v893 = vpop.trf.xlu0
    %v894 = vpop.trf.xlu0
    %v895 = vpop.trf.xlu0
    %v896 = vpop.trf.xlu0
    %897 = vxpose.xlu0.b32.start [1/16] %v753, 128
    %898 = vxpose.xlu0.b32.cont [2/16] %v754, 128
    %899 = vxpose.xlu0.b32.cont [3/16] %v755, 128
    %900 = vxpose.xlu0.b32.cont [4/16] %v756, 128
    %901 = vxpose.xlu0.b32.cont [5/16] %v757, 128
    %902 = vxpose.xlu0.b32.cont [6/16] %v758, 128
    %903 = vxpose.xlu0.b32.cont [7/16] %v759, 128
    %904 = vxpose.xlu0.b32.cont [8/16] %v760, 128
    %905 = vxpose.xlu0.b32.cont [9/16] %v761, 128
    %906 = vxpose.xlu0.b32.cont [10/16] %v762, 128
    %907 = vxpose.xlu0.b32.cont [11/16] %v763, 128
    %908 = vxpose.xlu0.b32.cont [12/16] %v764, 128
    %909 = vxpose.xlu0.b32.cont [13/16] %v765, 128
    %910 = vxpose.xlu0.b32.cont [14/16] %v766, 128
    %911 = vxpose.xlu0.b32.cont [15/16] %v767, 128
    %912 = vxpose.xlu0.b32.end [16/16] %v768, 128
    %v913 = vpop.trf.xlu0
    %v914 = vpop.trf.xlu0
    %v915 = vpop.trf.xlu0
    %v916 = vpop.trf.xlu0
    %v917 = vpop.trf.xlu0
    %v918 = vpop.trf.xlu0
    %v919 = vpop.trf.xlu0
    %v920 = vpop.trf.xlu0
    %v921 = vpop.trf.xlu0
    %v922 = vpop.trf.xlu0
    %v923 = vpop.trf.xlu0
    %v924 = vpop.trf.xlu0
    %v925 = vpop.trf.xlu0
    %v926 = vpop.trf.xlu0
    %v927 = vpop.trf.xlu0
    %v928 = vpop.trf.xlu0
    %v930 = vrot.slane %v849, 7
    %v933 = vrot.slane %v881, 6
    %v936 = vrot.slane %v913, 5
    %vm938 = vcmask 1040384
    %v939 = vsel %vm938, %v817, %v930
    %vm940 = vcmask 1041408
    %v941 = vsel %vm940, %v939, %v933
    %vm942 = vcmask 1042432
    %v943 = vsel %vm942, %v941, %v936
    %vm944 = vcmask 1043456
    %v945 = vsel %vm944, %v943, 0.0
    %946 = vst [vmem:[#allocation3] sm:$0xff] %v945
    // Predicated region
    $region14: #{tpu_custom_call.1} parent=1 // pred_check
      _
    $region15: #{tpu_custom_call.1} parent=1 // pred_check_branch
      %948 = sbr.rel (0) target = $region17
    $region16: #{tpu_custom_call.1} parent=1 // pred_region
      _
    $region17: #{tpu_custom_call.1} parent=1 // pred_fallthru
      _
    // Predicated region
    $region18: #{tpu_custom_call.1} parent=1 // pred_check
      _
    $region19: #{tpu_custom_call.1} parent=1 // pred_check_branch
      %950 = sbr.rel (0) target = $region21
    $region20: #{tpu_custom_call.1} parent=1 // pred_region
      _
    $region21: #{tpu_custom_call.1} parent=1 // pred_fallthru
      _
    // Predicated region
    $region22: #{tpu_custom_call.1} parent=1 // pred_check
      _
    $region23: #{tpu_custom_call.1} parent=1 // pred_check_branch
      %952 = sbr.rel (0) target = $region25
    $region24: #{tpu_custom_call.1} parent=1 // pred_region
      %s954 = ssub.s32 128, 128
      %955 = vsyncadd [#allocation4], %s954
      %s957 = sshll.u32 [#allocation3], 4
      %s958 = int_to_ptr.vmem [resolvable:$true] %s957
      %960 = dma.vmem_to_hbm [thread:$0]  %s958, 128, %s5, [#allocation4]
    $region25: #{tpu_custom_call.1} parent=1 // pred_fallthru
      _
    // Predicated region
    $region26: #{tpu_custom_call.1} parent=1 // pred_check
      _
    $region27: #{tpu_custom_call.1} parent=1 // pred_check_branch
      %962 = sbr.rel (0) target = $region29
    $region28: #{tpu_custom_call.1} parent=1 // pred_region
      _
    $region29: #{tpu_custom_call.1} parent=1 // pred_fallthru
      _
    // Predicated region
    $region30: #{tpu_custom_call.1} parent=1 // pred_check
      _
    $region31: #{tpu_custom_call.1} parent=1 // pred_check_branch
      %964 = sbr.rel (0) target = $region33
    $region32: #{tpu_custom_call.1} parent=1 // pred_region
      _
    $region33: #{tpu_custom_call.1} parent=1 // pred_fallthru
      _
    // Predicated region
    $region34: #{tpu_custom_call.1} parent=1 // pred_check
      _
    $region35: #{tpu_custom_call.1} parent=1 // pred_check_branch
      %966 = sbr.rel (0) target = $region37
    $region36: #{tpu_custom_call.1} parent=1 // pred_region
      %967 = dma.done [#allocation4], 128
    $region37: #{tpu_custom_call.1} parent=1 // pred_fallthru
      _
    %968 = vsyncpa [#allocation4], 1

</llo_original>
